<compile_context>
chip_gen: v5e
topology: v5e:2x2
jax: 0.10.0
libtpu: 0.0.40
codegen_flags: <defaults>
</compile_context>

<pallas_src>
import jax
import jax.numpy as jnp
from jax.experimental import pallas as pl
from jax.experimental.pallas import tpu as pltpu


def rnn_recurrence_kernel(pre_ref, whh_ref, wfc_ref, bfc_ref, out_ref):
    """Serial tanh-RNN recurrence + classifier head, fused in one invocation.

    pre_ref: (T, B, H)  precomputed x_t @ W_ih^T + (b_ih + b_hh), time-major
    whh_ref: (H, H)     W_hh^T
    wfc_ref: (H, C)     W_fc^T
    bfc_ref: (1, C)     b_fc
    out_ref: (B, C)     logits
    """
    T = pre_ref.shape[0]
    whh = whh_ref[...]                                    # (H, H), resident in vregs

    # h0 = zeros (torch default) => h1 = tanh(pre[0]); skip the zero matmul.
    # NOTE: valid only because h0 == 0; a nonzero initial state would need h0 @ W_hh.
    h = jnp.tanh(pre_ref[0])                              # (B, H)

    # Serial recurrence — only h @ W_hh^T + tanh sits on the critical chain.
    # T is small & static -> fully unrolled at trace time.
    # TODO(synk): for large T (>= ~64) switch to lax.fori_loop(..., unroll=4..8)
    # over the VMEM-resident pre_ref to avoid code-size / vreg-pressure blowup.
    for t in range(1, T):
        h = jnp.tanh(pre_ref[t]
                     + jnp.dot(h, whh, preferred_element_type=jnp.float32))

    # Final classifier on the last hidden state.
    # C=4 < 128 lanes -> one masked store; negligible for a single tiny write.
    logits = (jnp.dot(h, wfc_ref[...], preferred_element_type=jnp.float32)
              + bfc_ref[...])                             # (B, C)
    out_ref[...] = logits.astype(out_ref.dtype)


@jax.jit
def rnn_model_forward(x, w_ih, w_hh, b_ih, b_hh, w_fc, b_fc):
    """x: (B, T, F) float32 (batch-first, PyTorch layout). Returns (B, C) float32.

    Jitted so the layout ops + input projection below fuse into one XLA computation
    feeding the Pallas kernel (no per-op HBM round trips).
    """
    B, T, F = x.shape
    H = w_ih.shape[0]
    C = w_fc.shape[0]

    # Hoisted input projection (not on the serial chain): one (T*B, F) @ (F, H)
    # matmul handled by XLA, emitted directly in time-major (T, B, H) layout with
    # the pre-summed bias folded in.
    bias = (b_ih + b_hh).astype(jnp.float32)                       # (H,)
    pre_all = jnp.einsum('btf,hf->tbh', x, w_ih,
                         preferred_element_type=jnp.float32) + bias  # (T, B, H)

    whh_t = jnp.transpose(w_hh)                                    # (H, H)  = W_hh^T
    wfc_t = jnp.transpose(w_fc)                                    # (H, C)  = W_fc^T
    bfc = b_fc.reshape(1, C)                                       # (1, C)

    vmem = pltpu.MemorySpace.VMEM
    return pl.pallas_call(
        rnn_recurrence_kernel,
        out_shape=jax.ShapeDtypeStruct((B, C), jnp.float32),
        # No grid: single invocation, whole arrays resident in VMEM (~10 KB total).
        in_specs=[
            pl.BlockSpec(memory_space=vmem),   # pre_all (T, B, H)
            pl.BlockSpec(memory_space=vmem),   # W_hh^T
            pl.BlockSpec(memory_space=vmem),   # W_fc^T
            pl.BlockSpec(memory_space=vmem),   # b_fc
        ],
        out_specs=pl.BlockSpec(memory_space=vmem),
    )(pre_all, whh_t, wfc_t, bfc)


def rnn_model_reference(x, w_ih, w_hh, b_ih, b_hh, w_fc, b_fc):
    """Pure-JAX reference (matches torch.nn.RNN + Linear semantics)."""
    B, T, F = x.shape
    H = w_ih.shape[0]
    h = jnp.zeros((B, H), jnp.float32)
    for t in range(T):
        h = jnp.tanh(x[:, t, :] @ w_ih.T + b_ih + h @ w_hh.T + b_hh)
    return h @ w_fc.T + b_fc


if __name__ == "__main__":
    # Shapes consistent with the module: input_size=5, hidden_size=32,
    # num_classes=4, batch=2, seq_len=8.
    B, T, F, H, C = 2, 8, 5, 32, 4

    key = jax.random.PRNGKey(0)
    k = jax.random.split(key, 7)
    scale = 1.0 / jnp.sqrt(H)  # mimic PyTorch uniform(-1/sqrt(H), 1/sqrt(H)) init

    x = jax.random.normal(k[0], (B, T, F), jnp.float32)
    w_ih = jax.random.uniform(k[1], (H, F), jnp.float32, -scale, scale)
    w_hh = jax.random.uniform(k[2], (H, H), jnp.float32, -scale, scale)
    b_ih = jax.random.uniform(k[3], (H,), jnp.float32, -scale, scale)
    b_hh = jax.random.uniform(k[4], (H,), jnp.float32, -scale, scale)
    w_fc = jax.random.uniform(k[5], (C, H), jnp.float32, -scale, scale)
    b_fc = jax.random.uniform(k[6], (C,), jnp.float32, -scale, scale)

    out = rnn_model_forward(x, w_ih, w_hh, b_ih, b_hh, w_fc, b_fc)
    out = jax.block_until_ready(out)

    ref = rnn_model_reference(x, w_ih, w_hh, b_ih, b_hh, w_fc, b_fc)
    assert out.shape == (B, C)
    assert jnp.allclose(out, ref, atol=1e-5, rtol=1e-5), "mismatch vs reference"

    print("KERNEL_OK")
</pallas_src>

<mosaic_0001>
module attributes {stable_mosaic.version = 11 : i64} {
  func.func @rnn_recurrence_kernel(%arg0: memref<8x2x32xf32, #tpu.memory_space<vmem>>, %arg1: memref<32x32xf32, #tpu.memory_space<vmem>>, %arg2: memref<32x4xf32, #tpu.memory_space<vmem>>, %arg3: memref<1x4xf32, #tpu.memory_space<vmem>>, %arg4: memref<2x4xf32, #tpu.memory_space<vmem>>) attributes {dimension_semantics = [], scalar_prefetch = 0 : i64, scratch_operands = 0 : i64, tpu.core_type = #tpu.core_type<tc>} {
    %c0 = arith.constant 0 : index
    %c0_0 = arith.constant 0 : index
    %0 = vector.load %arg1[%c0, %c0_0] : memref<32x32xf32, #tpu.memory_space<vmem>>, vector<32x32xf32>
    %c0_1 = arith.constant 0 : index
    %c0_2 = arith.constant 0 : index
    %c0_3 = arith.constant 0 : index
    %1 = vector.load %arg0[%c0_1, %c0_2, %c0_3] : memref<8x2x32xf32, #tpu.memory_space<vmem>>, vector<1x2x32xf32>
    %2 = vector.shape_cast %1 : vector<1x2x32xf32> to vector<2x32xf32>
    %3 = math.tanh %2 : vector<2x32xf32>
    %c1 = arith.constant 1 : index
    %c0_4 = arith.constant 0 : index
    %c0_5 = arith.constant 0 : index
    %4 = vector.load %arg0[%c1, %c0_4, %c0_5] : memref<8x2x32xf32, #tpu.memory_space<vmem>>, vector<1x2x32xf32>
    %5 = vector.shape_cast %4 : vector<1x2x32xf32> to vector<2x32xf32>
    %cst = arith.constant dense<0.000000e+00> : vector<2x32xf32>
    %6 = tpu.matmul %3, %0, %cst {dimension_numbers = #tpu.dot_dimension_numbers<[1], [0], [0], [1], [0, 0, 1, 1], [], []>} : vector<2x32xf32>, vector<32x32xf32>, vector<2x32xf32> -> vector<2x32xf32>
    %7 = arith.addf %5, %6 : vector<2x32xf32>
    %8 = math.tanh %7 : vector<2x32xf32>
    %c2 = arith.constant 2 : index
    %c0_6 = arith.constant 0 : index
    %c0_7 = arith.constant 0 : index
    %9 = vector.load %arg0[%c2, %c0_6, %c0_7] : memref<8x2x32xf32, #tpu.memory_space<vmem>>, vector<1x2x32xf32>
    %10 = vector.shape_cast %9 : vector<1x2x32xf32> to vector<2x32xf32>
    %cst_8 = arith.constant dense<0.000000e+00> : vector<2x32xf32>
    %11 = tpu.matmul %8, %0, %cst_8 {dimension_numbers = #tpu.dot_dimension_numbers<[1], [0], [0], [1], [0, 0, 1, 1], [], []>} : vector<2x32xf32>, vector<32x32xf32>, vector<2x32xf32> -> vector<2x32xf32>
    %12 = arith.addf %10, %11 : vector<2x32xf32>
    %13 = math.tanh %12 : vector<2x32xf32>
    %c3 = arith.constant 3 : index
    %c0_9 = arith.constant 0 : index
    %c0_10 = arith.constant 0 : index
    %14 = vector.load %arg0[%c3, %c0_9, %c0_10] : memref<8x2x32xf32, #tpu.memory_space<vmem>>, vector<1x2x32xf32>
    %15 = vector.shape_cast %14 : vector<1x2x32xf32> to vector<2x32xf32>
    %cst_11 = arith.constant dense<0.000000e+00> : vector<2x32xf32>
    %16 = tpu.matmul %13, %0, %cst_11 {dimension_numbers = #tpu.dot_dimension_numbers<[1], [0], [0], [1], [0, 0, 1, 1], [], []>} : vector<2x32xf32>, vector<32x32xf32>, vector<2x32xf32> -> vector<2x32xf32>
    %17 = arith.addf %15, %16 : vector<2x32xf32>
    %18 = math.tanh %17 : vector<2x32xf32>
    %c4 = arith.constant 4 : index
    %c0_12 = arith.constant 0 : index
    %c0_13 = arith.constant 0 : index
    %19 = vector.load %arg0[%c4, %c0_12, %c0_13] : memref<8x2x32xf32, #tpu.memory_space<vmem>>, vector<1x2x32xf32>
    %20 = vector.shape_cast %19 : vector<1x2x32xf32> to vector<2x32xf32>
    %cst_14 = arith.constant dense<0.000000e+00> : vector<2x32xf32>
    %21 = tpu.matmul %18, %0, %cst_14 {dimension_numbers = #tpu.dot_dimension_numbers<[1], [0], [0], [1], [0, 0, 1, 1], [], []>} : vector<2x32xf32>, vector<32x32xf32>, vector<2x32xf32> -> vector<2x32xf32>
    %22 = arith.addf %20, %21 : vector<2x32xf32>
    %23 = math.tanh %22 : vector<2x32xf32>
    %c5 = arith.constant 5 : index
    %c0_15 = arith.constant 0 : index
    %c0_16 = arith.constant 0 : index
    %24 = vector.load %arg0[%c5, %c0_15, %c0_16] : memref<8x2x32xf32, #tpu.memory_space<vmem>>, vector<1x2x32xf32>
    %25 = vector.shape_cast %24 : vector<1x2x32xf32> to vector<2x32xf32>
    %cst_17 = arith.constant dense<0.000000e+00> : vector<2x32xf32>
    %26 = tpu.matmul %23, %0, %cst_17 {dimension_numbers = #tpu.dot_dimension_numbers<[1], [0], [0], [1], [0, 0, 1, 1], [], []>} : vector<2x32xf32>, vector<32x32xf32>, vector<2x32xf32> -> vector<2x32xf32>
    %27 = arith.addf %25, %26 : vector<2x32xf32>
    %28 = math.tanh %27 : vector<2x32xf32>
    %c6 = arith.constant 6 : index
    %c0_18 = arith.constant 0 : index
    %c0_19 = arith.constant 0 : index
    %29 = vector.load %arg0[%c6, %c0_18, %c0_19] : memref<8x2x32xf32, #tpu.memory_space<vmem>>, vector<1x2x32xf32>
    %30 = vector.shape_cast %29 : vector<1x2x32xf32> to vector<2x32xf32>
    %cst_20 = arith.constant dense<0.000000e+00> : vector<2x32xf32>
    %31 = tpu.matmul %28, %0, %cst_20 {dimension_numbers = #tpu.dot_dimension_numbers<[1], [0], [0], [1], [0, 0, 1, 1], [], []>} : vector<2x32xf32>, vector<32x32xf32>, vector<2x32xf32> -> vector<2x32xf32>
    %32 = arith.addf %30, %31 : vector<2x32xf32>
    %33 = math.tanh %32 : vector<2x32xf32>
    %c7 = arith.constant 7 : index
    %c0_21 = arith.constant 0 : index
    %c0_22 = arith.constant 0 : index
    %34 = vector.load %arg0[%c7, %c0_21, %c0_22] : memref<8x2x32xf32, #tpu.memory_space<vmem>>, vector<1x2x32xf32>
    %35 = vector.shape_cast %34 : vector<1x2x32xf32> to vector<2x32xf32>
    %cst_23 = arith.constant dense<0.000000e+00> : vector<2x32xf32>
    %36 = tpu.matmul %33, %0, %cst_23 {dimension_numbers = #tpu.dot_dimension_numbers<[1], [0], [0], [1], [0, 0, 1, 1], [], []>} : vector<2x32xf32>, vector<32x32xf32>, vector<2x32xf32> -> vector<2x32xf32>
    %37 = arith.addf %35, %36 : vector<2x32xf32>
    %38 = math.tanh %37 : vector<2x32xf32>
    %c0_24 = arith.constant 0 : index
    %c0_25 = arith.constant 0 : index
    %39 = vector.load %arg2[%c0_24, %c0_25] : memref<32x4xf32, #tpu.memory_space<vmem>>, vector<32x4xf32>
    %cst_26 = arith.constant dense<0.000000e+00> : vector<2x4xf32>
    %40 = tpu.matmul %38, %39, %cst_26 {dimension_numbers = #tpu.dot_dimension_numbers<[1], [0], [0], [1], [0, 0, 1, 1], [], []>} : vector<2x32xf32>, vector<32x4xf32>, vector<2x4xf32> -> vector<2x4xf32>
    %c0_27 = arith.constant 0 : index
    %c0_28 = arith.constant 0 : index
    %41 = vector.load %arg3[%c0_27, %c0_28] : memref<1x4xf32, #tpu.memory_space<vmem>>, vector<1x4xf32>
    %42 = vector.broadcast %41 : vector<1x4xf32> to vector<2x4xf32>
    %43 = arith.addf %40, %42 : vector<2x4xf32>
    %c0_29 = arith.constant 0 : index
    %c0_30 = arith.constant 0 : index
    %44 = vector.load %arg4[%c0_29, %c0_30] : memref<2x4xf32, #tpu.memory_space<vmem>>, vector<2x4xf32>
    tpu.vector_store %arg4[%c0_29, %c0_30], %43 {strides = array<i32>} : memref<2x4xf32, #tpu.memory_space<vmem>>, vector<2x4xf32>,
    return
  }
}

</mosaic_0001>

<llo_original>
// kernel: rnn_model_forward.1
$region0: #{rnn_model_forward.1}
  #allocation0 [shape = 'u32[]', space=smem, size = 0x4, offset = 0x4, fixed_abs, tag = 'smem constant byte address 0x4 - core index']
  #allocation1 [shape = 'u32[72,128]{1,0:T(1,128)}', space=vmem, size = 0x9000, scoped, tag = 'internal scratch']
  %s0 = inlined_call_operand.vmem [shape: f32[8,2,32], index: 0, kind: input, shape index: {}]
  %s1 = inlined_call_operand.vmem [shape: f32[32,32], index: 1, kind: input, shape index: {}]
  %s2 = inlined_call_operand.vmem [shape: f32[32,4], index: 2, kind: input, shape index: {}]
  %s3 = inlined_call_operand.vmem [shape: f32[1,4], index: 3, kind: input, shape index: {}]
  %s4 = inlined_call_operand.hbm [shape: f32[2,4], index: 4, kind: output, shape index: {}]
  %s5 = sld [smem:[#allocation0]]
  $region26: #{rnn_model_forward.1} parent=0
    _
  %s7 = ssub.s32 1, %s5
  %s8 = scalar_select 0, %s7, %s5
  $region1: #{rnn_model_forward.1} parent=0
    #allocation2 [shape = 'u8[1024]{0}', space=vmem, size = 0x400, scoped, tag = 'output window, operand 0, single buffered']
    #allocation3 [shape = 's32[1]{0}', space=sflag, size = 0x4, scoped, tag = 'scoped memory for rnn_model_forward.1']
    %9 = vsyncpa [#allocation3], 0
    // Predicated region
    $region2: #{rnn_model_forward.1} parent=1 // pred_check
      _
    $region3: #{rnn_model_forward.1} parent=1 // pred_check_branch
      %11 = sbr.rel (0) target = $region5
    $region4: #{rnn_model_forward.1} parent=1 // pred_region
      _
    $region5: #{rnn_model_forward.1} parent=1 // pred_fallthru
      _
    // Predicated region
    $region6: #{rnn_model_forward.1} parent=1 // pred_check
      _
    $region7: #{rnn_model_forward.1} parent=1 // pred_check_branch
      %13 = sbr.rel (0) target = $region9
    $region8: #{rnn_model_forward.1} parent=1 // pred_region
      _
    $region9: #{rnn_model_forward.1} parent=1 // pred_fallthru
      _
    // Predicated region
    $region10: #{rnn_model_forward.1} parent=1 // pred_check
      _
    $region11: #{rnn_model_forward.1} parent=1 // pred_check_branch
      %15 = sbr.rel (0) target = $region13
    $region12: #{rnn_model_forward.1} parent=1 // pred_region
      _
    $region13: #{rnn_model_forward.1} parent=1 // pred_fallthru
      _
    // Predicated region
    $region14: #{rnn_model_forward.1} parent=1 // pred_check
      _
    $region15: #{rnn_model_forward.1} parent=1 // pred_check_branch
      %17 = sbr.rel (0) target = $region17
    $region16: #{rnn_model_forward.1} parent=1 // pred_region
      _
    $region17: #{rnn_model_forward.1} parent=1 // pred_fallthru
      _
    %v18 = vld [vmem:[%s1] sm:$0xff]
    %v19 = vld [vmem:[%s1 + $0x8] sm:$0xff]
    %v20 = vld [vmem:[%s1 + $0x10] sm:$0xff]
    %v21 = vld [vmem:[%s1 + $0x18] sm:$0xff]
    %v22 = vld [vmem:[%s0] sm:$0x3]
    %v23 = vtanh.pop %v22
    %s24 = scalar_lea.vmem %s0, 2
    %v25 = vld [vmem:[%s24] sm:$0x3]
    %vm26 = vcmask 261120
    %v28 = vsel %vm26, %v23, 0
    %30 = vmatpush.msra.mxu0 0.0
    %31 = vmatpush.msra.mxu0 0.0
    %32 = vmatpush.msra.mxu0 0.0
    %33 = vmatpush.msra.mxu0 0.0
    %34 = vmatpush.msra.mxu0 0.0
    %35 = vmatpush.msra.mxu0 0.0
    %36 = vmatpush.msra.mxu0 0.0
    %37 = vmatpush.msra.mxu0 0.0
    %38 = vmatpush.msra.mxu0 0.0
    %39 = vmatpush.msra.mxu0 0.0
    %40 = vmatpush.msra.mxu0 0.0
    %41 = vmatpush.msra.mxu0 0.0
    %42 = vmatpush.msra.mxu0 %v21
    %43 = vmatpush.msra.mxu0 %v20
    %44 = vmatpush.msra.mxu0 %v19
    %45 = vmatpush.msra.mxu0 %v18
    %46 = vmatmul.f32.gmra.mxu0 %v28
    %v47 = vpop.f32.mrf.mxu0
    %v48 = vadd.f32 0.0, %v47
    %49 = vdwg.mxu0
    %v50 = vadd.f32 %v25, %v48
    %v51 = vtanh.pop %v50
    %s52 = scalar_lea.vmem %s0, 4
    %v53 = vld [vmem:[%s52] sm:$0x3]
    %v55 = vsel %vm26, %v51, 0
    %57 = vmatpush.msra.mxu0 0.0
    %58 = vmatpush.msra.mxu0 0.0
    %59 = vmatpush.msra.mxu0 0.0
    %60 = vmatpush.msra.mxu0 0.0
    %61 = vmatpush.msra.mxu0 0.0
    %62 = vmatpush.msra.mxu0 0.0
    %63 = vmatpush.msra.mxu0 0.0
    %64 = vmatpush.msra.mxu0 0.0
    %65 = vmatpush.msra.mxu0 0.0
    %66 = vmatpush.msra.mxu0 0.0
    %67 = vmatpush.msra.mxu0 0.0
    %68 = vmatpush.msra.mxu0 0.0
    %69 = vmatpush.msra.mxu0 %v21
    %70 = vmatpush.msra.mxu0 %v20
    %71 = vmatpush.msra.mxu0 %v19
    %72 = vmatpush.msra.mxu0 %v18
    %73 = vmatmul.f32.gmra.mxu0 %v55
    %v74 = vpop.f32.mrf.mxu0
    %v75 = vadd.f32 0.0, %v74
    %76 = vdwg.mxu0
    %v77 = vadd.f32 %v53, %v75
    %v78 = vtanh.pop %v77
    %s79 = scalar_lea.vmem %s0, 6
    %v80 = vld [vmem:[%s79] sm:$0x3]
    %v82 = vsel %vm26, %v78, 0
    %84 = vmatpush.msra.mxu0 0.0
    %85 = vmatpush.msra.mxu0 0.0
    %86 = vmatpush.msra.mxu0 0.0
    %87 = vmatpush.msra.mxu0 0.0
    %88 = vmatpush.msra.mxu0 0.0
    %89 = vmatpush.msra.mxu0 0.0
    %90 = vmatpush.msra.mxu0 0.0
    %91 = vmatpush.msra.mxu0 0.0
    %92 = vmatpush.msra.mxu0 0.0
    %93 = vmatpush.msra.mxu0 0.0
    %94 = vmatpush.msra.mxu0 0.0
    %95 = vmatpush.msra.mxu0 0.0
    %96 = vmatpush.msra.mxu0 %v21
    %97 = vmatpush.msra.mxu0 %v20
    %98 = vmatpush.msra.mxu0 %v19
    %99 = vmatpush.msra.mxu0 %v18
    %100 = vmatmul.f32.gmra.mxu0 %v82
    %v101 = vpop.f32.mrf.mxu0
    %v102 = vadd.f32 0.0, %v101
    %103 = vdwg.mxu0
    %v104 = vadd.f32 %v80, %v102
    %v105 = vtanh.pop %v104
    %s106 = scalar_lea.vmem %s0, 8
    %v107 = vld [vmem:[%s106] sm:$0x3]
    %v109 = vsel %vm26, %v105, 0
    %111 = vmatpush.msra.mxu0 0.0
    %112 = vmatpush.msra.mxu0 0.0
    %113 = vmatpush.msra.mxu0 0.0
    %114 = vmatpush.msra.mxu0 0.0
    %115 = vmatpush.msra.mxu0 0.0
    %116 = vmatpush.msra.mxu0 0.0
    %117 = vmatpush.msra.mxu0 0.0
    %118 = vmatpush.msra.mxu0 0.0
    %119 = vmatpush.msra.mxu0 0.0
    %120 = vmatpush.msra.mxu0 0.0
    %121 = vmatpush.msra.mxu0 0.0
    %122 = vmatpush.msra.mxu0 0.0
    %123 = vmatpush.msra.mxu0 %v21
    %124 = vmatpush.msra.mxu0 %v20
    %125 = vmatpush.msra.mxu0 %v19
    %126 = vmatpush.msra.mxu0 %v18
    %127 = vmatmul.f32.gmra.mxu0 %v109
    %v128 = vpop.f32.mrf.mxu0
    %v129 = vadd.f32 0.0, %v128
    %130 = vdwg.mxu0
    %v131 = vadd.f32 %v107, %v129
    %v132 = vtanh.pop %v131
    %s133 = scalar_lea.vmem %s0, 10
    %v134 = vld [vmem:[%s133] sm:$0x3]
    %v136 = vsel %vm26, %v132, 0
    %138 = vmatpush.msra.mxu0 0.0
    %139 = vmatpush.msra.mxu0 0.0
    %140 = vmatpush.msra.mxu0 0.0
    %141 = vmatpush.msra.mxu0 0.0
    %142 = vmatpush.msra.mxu0 0.0
    %143 = vmatpush.msra.mxu0 0.0
    %144 = vmatpush.msra.mxu0 0.0
    %145 = vmatpush.msra.mxu0 0.0
    %146 = vmatpush.msra.mxu0 0.0
    %147 = vmatpush.msra.mxu0 0.0
    %148 = vmatpush.msra.mxu0 0.0
    %149 = vmatpush.msra.mxu0 0.0
    %150 = vmatpush.msra.mxu0 %v21
    %151 = vmatpush.msra.mxu0 %v20
    %152 = vmatpush.msra.mxu0 %v19
    %153 = vmatpush.msra.mxu0 %v18
    %154 = vmatmul.f32.gmra.mxu0 %v136
    %v155 = vpop.f32.mrf.mxu0
    %v156 = vadd.f32 0.0, %v155
    %157 = vdwg.mxu0
    %v158 = vadd.f32 %v134, %v156
    %v159 = vtanh.pop %v158
    %s160 = scalar_lea.vmem %s0, 12
    %v161 = vld [vmem:[%s160] sm:$0x3]
    %v163 = vsel %vm26, %v159, 0
    %165 = vmatpush.msra.mxu0 0.0
    %166 = vmatpush.msra.mxu0 0.0
    %167 = vmatpush.msra.mxu0 0.0
    %168 = vmatpush.msra.mxu0 0.0
    %169 = vmatpush.msra.mxu0 0.0
    %170 = vmatpush.msra.mxu0 0.0
    %171 = vmatpush.msra.mxu0 0.0
    %172 = vmatpush.msra.mxu0 0.0
    %173 = vmatpush.msra.mxu0 0.0
    %174 = vmatpush.msra.mxu0 0.0
    %175 = vmatpush.msra.mxu0 0.0
    %176 = vmatpush.msra.mxu0 0.0
    %177 = vmatpush.msra.mxu0 %v21
    %178 = vmatpush.msra.mxu0 %v20
    %179 = vmatpush.msra.mxu0 %v19
    %180 = vmatpush.msra.mxu0 %v18
    %181 = vmatmul.f32.gmra.mxu0 %v163
    %v182 = vpop.f32.mrf.mxu0
    %v183 = vadd.f32 0.0, %v182
    %184 = vdwg.mxu0
    %v185 = vadd.f32 %v161, %v183
    %v186 = vtanh.pop %v185
    %s187 = scalar_lea.vmem %s0, 14
    %v188 = vld [vmem:[%s187] sm:$0x3]
    %v190 = vsel %vm26, %v186, 0
    %192 = vmatpush.msra.mxu0 0.0
    %193 = vmatpush.msra.mxu0 0.0
    %194 = vmatpush.msra.mxu0 0.0
    %195 = vmatpush.msra.mxu0 0.0
    %196 = vmatpush.msra.mxu0 0.0
    %197 = vmatpush.msra.mxu0 0.0
    %198 = vmatpush.msra.mxu0 0.0
    %199 = vmatpush.msra.mxu0 0.0
    %200 = vmatpush.msra.mxu0 0.0
    %201 = vmatpush.msra.mxu0 0.0
    %202 = vmatpush.msra.mxu0 0.0
    %203 = vmatpush.msra.mxu0 0.0
    %204 = vmatpush.msra.mxu0 %v21
    %205 = vmatpush.msra.mxu0 %v20
    %206 = vmatpush.msra.mxu0 %v19
    %207 = vmatpush.msra.mxu0 %v18
    %208 = vmatmul.f32.gmra.mxu0 %v190
    %v209 = vpop.f32.mrf.mxu0
    %v210 = vadd.f32 0.0, %v209
    %211 = vdwg.mxu0
    %v212 = vadd.f32 %v188, %v210
    %v213 = vtanh.pop %v212
    %v214 = vld [vmem:[%s2] sm:$0xff]
    %v215 = vld [vmem:[%s2 + $0x8] sm:$0xff]
    %v216 = vld [vmem:[%s2 + $0x10] sm:$0xff]
    %v217 = vld [vmem:[%s2 + $0x18] sm:$0xff]
    %v218 = vld [vmem:[%s3] sm:$0x1]
    %v220 = vperm.slane %v218, 0
    %v223 = vsel %vm26, %v213, 0
    %225 = vmatpush.msra.mxu0 0.0
    %226 = vmatpush.msra.mxu0 0.0
    %227 = vmatpush.msra.mxu0 0.0
    %228 = vmatpush.msra.mxu0 0.0
    %229 = vmatpush.msra.mxu0 0.0
    %230 = vmatpush.msra.mxu0 0.0
    %231 = vmatpush.msra.mxu0 0.0
    %232 = vmatpush.msra.mxu0 0.0
    %233 = vmatpush.msra.mxu0 0.0
    %234 = vmatpush.msra.mxu0 0.0
    %235 = vmatpush.msra.mxu0 0.0
    %236 = vmatpush.msra.mxu0 0.0
    %237 = vmatpush.msra.mxu0 %v217
    %238 = vmatpush.msra.mxu0 %v216
    %239 = vmatpush.msra.mxu0 %v215
    %240 = vmatpush.msra.mxu0 %v214
    %241 = vmatmul.f32.gmra.mxu0 %v223
    %v242 = vpop.f32.mrf.mxu0
    %v243 = vadd.f32 %v220, %v242
    %244 = vdwg.mxu0
    %vm245 = vcmask 25600
    %246 = vst.msk [vmem:[#allocation2] sm:$0x3] %vm245, %v243
    // Predicated region
    $region18: #{rnn_model_forward.1} parent=1 // pred_check
      _
    $region19: #{rnn_model_forward.1} parent=1 // pred_check_branch
      %248 = sbr.rel (0) target = $region21
    $region20: #{rnn_model_forward.1} parent=1 // pred_region
      %250 = vsyncadd [#allocation3], 0
      %s252 = sshll.u32 [#allocation2], 4
      %s253 = int_to_ptr.vmem [resolvable:$true] %s252
      %s254 = sshll.u32 %s4, 4
      %s255 = int_to_ptr.hbm [resolvable:$true] %s254
      %257 = dma.vmem_to_hbm [thread:$0]  %s253, 32, %s255, [#allocation3]
    $region21: #{rnn_model_forward.1} parent=1 // pred_fallthru
      _
    // Predicated region
    $region22: #{rnn_model_forward.1} parent=1 // pred_check
      _
    $region23: #{rnn_model_forward.1} parent=1 // pred_check_branch
      %259 = sbr.rel (0) target = $region25
    $region24: #{rnn_model_forward.1} parent=1 // pred_region
      %261 = dma.done [#allocation3], 32
    $region25: #{rnn_model_forward.1} parent=1 // pred_fallthru
      _
    %262 = vsyncpa [#allocation3], 1

</llo_original>
